<compile_context>
chip_gen: v7x
topology: tpu7x:2x2x1
jax: 0.10.0
libtpu: 0.0.40
codegen_flags: <defaults>
</compile_context>

<pallas_src>
from functools import partial

import jax
import jax.numpy as jnp
from jax.experimental import pallas as pl
from jax.experimental.pallas import tpu as pltpu


def _round_up(x: int, m: int) -> int:
    return -(-x // m) * m


def _vmem_capacity_bytes() -> int:
    """Physical VMEM per TensorCore; conservative fallback if query fails."""
    try:
        info = pltpu.get_tpu_info()
        cap = getattr(info, "vmem_capacity_bytes", None)
        if cap:
            return int(cap)
    except Exception:
        pass
    return 64 << 20  # v7x per-TC size (most restrictive)


def _num_tensorcores() -> int:
    """2 on v7x-class chips (megacore), else 1."""
    try:
        kind = jax.devices()[0].device_kind.lower()
        if "v7" in kind or "7x" in kind:
            return 2
    except Exception:
        pass
    return 1


def _vmem_block_bytes(shape, itemsize: int) -> int:
    """VMEM footprint of a block: last dim pads to 128 lanes, 2nd-last to the
    sublane pack size for this dtype."""
    sub = max(8, 32 // itemsize)
    dims = list(shape)
    dims[-1] = _round_up(dims[-1], 128)
    if len(dims) >= 2:
        dims[-2] = _round_up(dims[-2], sub)
    n = 1
    for d in dims:
        n *= d
    return n * itemsize


def _pool_kernel(x_ref, o_ref, acc_ref, *, pool: str, inv_n: float,
                 neutral, n_valid: int, tile_n: int,
                 mask_tail: bool, group: bool):
    """One (Bt, tN, CM) node block -> running (Bt[,8], CM) reduction."""
    k = pl.program_id(1)           # node (reduction) axis, last in the grid
    n_k = pl.num_programs(1)

    @pl.when(k == 0)
    def _init():
        init_val = neutral if pool == "max" else 0
        acc_ref[...] = jnp.full(acc_ref.shape, init_val, acc_ref.dtype)

    x = x_ref[...]
    if pool == "avg":
        x = x.astype(jnp.float32)  # f32 accumulation (bf16-safe); max is exact

    if mask_tail:
        # Mask garbage rows of the (possibly OOB) last node block.
        node_idx = k * tile_n + jax.lax.broadcasted_iota(jnp.int32, x.shape, 1)
        fill = jnp.asarray(neutral if pool == "max" else 0, dtype=x.dtype)
        x = jnp.where(node_idx < n_valid, x, fill)

    if group:
        # Fold the node tile into 8-row groups: the per-step reduce is then an
        # elementwise (VPU) max/add across vreg rows; the single cross-sublane
        # (XLU) reduce happens once in the finalize below.
        bt, tn, cm = x.shape
        x = x.reshape(bt, tn // 8, 8, cm)

    if pool == "max":
        acc_ref[...] = jnp.maximum(acc_ref[...], jnp.max(x, axis=1))
    else:
        acc_ref[...] = acc_ref[...] + jnp.sum(x, axis=1)

    @pl.when(k == n_k - 1)
    def _finalize():
        r = acc_ref[...]
        if group:
            r = jnp.max(r, axis=1) if pool == "max" else jnp.sum(r, axis=1)
        if pool == "avg":
            r = r * inv_n
        o_ref[...] = r.astype(o_ref.dtype)


def _graph_pool(x_bnc: jax.Array, pool: str,
                *, target_block_bytes: int | None = None) -> jax.Array:
    """x_bnc: [B, N, CM] -> [B, CM], pooled (max/avg) over the node axis."""
    assert pool in ("max", "avg")
    B, N, CM = x_bnc.shape
    assert B >= 1 and N >= 1 and CM >= 1
    dtype = x_bnc.dtype
    itemsize = jnp.dtype(dtype).itemsize

    # Per-generation budgets.
    vmem_cap = _vmem_capacity_bytes()
    small_vmem = vmem_cap <= (64 << 20)            # v7x-class
    if target_block_bytes is None:
        target_block_bytes = (6 << 20) if small_vmem else (12 << 20)
    safe_cap = (52 << 20) if small_vmem else (100 << 20)

    if jnp.issubdtype(dtype, jnp.floating):
        neutral = float("-inf")
    else:
        neutral = int(jnp.iinfo(dtype).min)

    gran = max(8, 32 // itemsize)                  # sublane pack per dtype
    row_bytes_v = _round_up(CM, 128) * itemsize    # VMEM bytes per node row

    # ---- choose Bt (graphs per block) first --------------------------------
    Bt = B
    if _num_tensorcores() >= 2 and B > 8:
        # Give each v7x TensorCore at least one full-width graph block.
        half = _round_up(pl.cdiv(B, 2), 8)
        if half < B:
            Bt = half
    if B > 8 and Bt * gran * row_bytes_v > target_block_bytes:
        # Even a minimum node slab would blow the budget: shrink Bt (mult of 8).
        fit = target_block_bytes // (gran * row_bytes_v)
        Bt = min(Bt, max(8, (fit // 8) * 8))

    # ---- then tN (node tile) from the remaining budget ----------------------
    cap = max(1, target_block_bytes // (Bt * row_bytes_v))
    if cap >= N:
        tN = N
    else:
        tN = (cap // gran) * gran
        if tN < gran:
            tN = gran
        if tN >= N:
            tN = N

    mask_tail = (tN < N) and (N % tN != 0)
    group = (tN % 8 == 0)
    acc_dtype = dtype if pool == "max" else jnp.float32
    acc_itemsize = jnp.dtype(acc_dtype).itemsize

    def footprint(bt: int, tn: int) -> int:
        in_blk = _vmem_block_bytes((bt, tn, CM), itemsize)
        out_blk = _vmem_block_bytes((bt, CM), itemsize)
        acc_shape = (bt, 8, CM) if (tn % 8 == 0) else (bt, CM)
        acc_blk = _vmem_block_bytes(acc_shape, acc_itemsize)
        return 2 * in_blk + 2 * out_blk + acc_blk   # double-buffered I/O + acc

    # Shrink the block (never the limit) if the footprint would not fit.
    while footprint(Bt, tN) > safe_cap and tN > gran:
        tN = max(gran, ((tN // 2) // gran) * gran)
        mask_tail = (tN < N) and (N % tN != 0)
        group = (tN % 8 == 0)
    while footprint(Bt, tN) > safe_cap and B > 8 and Bt > 8:
        Bt = max(8, ((Bt // 2) // 8) * 8)

    needed = footprint(Bt, tN)
    vmem_limit = int(min(max(needed + (8 << 20), 32 << 20), safe_cap))
    if needed + (2 << 20) > vmem_limit:            # pathological shapes only
        vmem_limit = int(min(needed + (2 << 20), vmem_cap))

    grid = (pl.cdiv(B, Bt), pl.cdiv(N, tN))        # node reduction axis last
    acc_shape = (Bt, 8, CM) if group else (Bt, CM)

    kernel = partial(
        _pool_kernel, pool=pool, inv_n=1.0 / N, neutral=neutral,
        n_valid=N, tile_n=tN, mask_tail=mask_tail, group=group,
    )

    # NOTE: out block is tiny and written once per (b) sequence; Buffered(1)
    # would shave a few KiB of VMEM but is skipped to minimize compile risk.
    out = pl.pallas_call(
        kernel,
        out_shape=jax.ShapeDtypeStruct((B, CM), dtype),
        grid_spec=pltpu.PrefetchScalarGridSpec(
            num_scalar_prefetch=0,
            grid=grid,
            in_specs=[pl.BlockSpec((Bt, tN, CM), lambda b, k: (b, k, 0))],
            out_specs=pl.BlockSpec((Bt, CM), lambda b, k: (b, 0)),
            scratch_shapes=[pltpu.VMEM(acc_shape, acc_dtype)],
        ),
        compiler_params=pltpu.CompilerParams(
            dimension_semantics=("parallel", "arbitrary"),
            vmem_limit_bytes=vmem_limit,
        ),
        cost_estimate=pl.CostEstimate(
            flops=B * N * CM,
            transcendentals=0,
            bytes_accessed=(B * N * CM + B * CM) * itemsize,
        ),
    )(x_bnc)

    return out


class GPooling:
    """JAX/Pallas re-implementation of SE3Transformer GPooling (forward)."""

    def __init__(self, feat_type: int = 0, pool: str = "max"):
        assert pool in ("max", "avg"), f"Unknown pooling: {pool}"
        assert feat_type == 0 or pool == "avg", (
            "Max pooling on type > 0 features will break equivariance"
        )
        self.feat_type = feat_type
        self.pool = pool

    def __call__(self, features: dict, n_nodes_per_graph: int) -> jax.Array:
        # features[str(feat_type)]: [total_nodes, C, 2*feat_type+1]
        feat = features[str(self.feat_type)]
        total_nodes, C, M = feat.shape
        assert M == 2 * self.feat_type + 1
        assert total_nodes % n_nodes_per_graph == 0
        B = total_nodes // n_nodes_per_graph

        x = feat.reshape(B, n_nodes_per_graph, C * M)   # glue reshape only
        pooled = _graph_pool(x, self.pool)              # [B, C*M]
        pooled = pooled.reshape(B, C, M)
        # torch's .squeeze(dim=-1): only squeezes when last dim == 1
        if M == 1:
            pooled = pooled.reshape(B, C)
        return pooled


if __name__ == "__main__":
    key = jax.random.PRNGKey(0)
    k0, k1, k2, k3 = jax.random.split(key, 4)

    # --- type-0 features: batch of 2 graphs, 8 nodes each, 32 channels ----
    B, N, C = 2, 8, 32
    feats0 = jax.random.normal(k0, (B * N, C, 1), dtype=jnp.float32)
    features = {"0": feats0}

    out_max = GPooling(feat_type=0, pool="max")(features, n_nodes_per_graph=N)
    out_avg = GPooling(feat_type=0, pool="avg")(features, n_nodes_per_graph=N)
    out_max, out_avg = jax.block_until_ready((out_max, out_avg))

    ref0 = feats0.reshape(B, N, C)
    assert out_max.shape == (B, C) and out_avg.shape == (B, C)
    assert jnp.allclose(out_max, jnp.max(ref0, axis=1), atol=1e-6)
    assert jnp.allclose(out_avg, jnp.mean(ref0, axis=1), atol=1e-6)

    # --- type-1 features (M=3), avg pooling: CM=48, no host-side padding ---
    C1, M1 = 16, 3
    feats1 = jax.random.normal(k1, (B * N, C1, M1), dtype=jnp.float32)
    out1 = GPooling(feat_type=1, pool="avg")({"1": feats1}, n_nodes_per_graph=N)
    out1 = jax.block_until_ready(out1)
    ref1 = jnp.mean(feats1.reshape(B, N, C1, M1), axis=1)
    assert out1.shape == (B, C1, M1)
    assert jnp.allclose(out1, ref1, atol=1e-6)

    # --- tiled reduction with a ragged node tail (N % tN != 0) ------------
    B2, N2, CM2 = 4, 100, 32
    x2 = jax.random.normal(k2, (B2, N2, CM2), dtype=jnp.float32)
    tmax = _graph_pool(x2, "max", target_block_bytes=8 * 1024)
    tavg = _graph_pool(x2, "avg", target_block_bytes=8 * 1024)
    tmax, tavg = jax.block_until_ready((tmax, tavg))
    assert jnp.allclose(tmax, jnp.max(x2, axis=1), atol=1e-6)
    assert jnp.allclose(tavg, jnp.mean(x2, axis=1), atol=1e-5)

    # --- bf16 max, tiled + masked tail (no f32 cast path; max is exact) ---
    x3 = jax.random.normal(k3, (2, 40, 128), dtype=jnp.float32).astype(jnp.bfloat16)
    bmax = jax.block_until_ready(_graph_pool(x3, "max", target_block_bytes=4 * 1024))
    assert jnp.array_equal(bmax, jnp.max(x3, axis=1))

    print("KERNEL_OK")
</pallas_src>

<mosaic_0001>
module attributes {stable_mosaic.version = 11 : i64} {
  func.func @_pool_kernel(%arg0: i32, %arg1: i32, %arg2: memref<2x8x32xf32, #tpu.memory_space<vmem>>, %arg3: memref<2x32xf32, #tpu.memory_space<vmem>>, %arg4: memref<2x8x32xf32, #tpu.memory_space<vmem>>) attributes {dimension_semantics = [#tpu.dimension_semantics<parallel>, #tpu.dimension_semantics<arbitrary>], iteration_bounds = array<i64: 1, 1>, scalar_prefetch = 0 : i64, scratch_operands = 1 : i64, tpu.core_type = #tpu.core_type<tc>, window_params = [{transform_indices = @transform_0, window_bounds = array<i64: 2, 8, 32>}, {transform_indices = @transform_1, window_bounds = array<i64: 2, 32>}]} {
    %c0_i32 = arith.constant 0 : i32
    %0 = arith.cmpi eq, %arg1, %c0_i32 : i32
    %1 = arith.extui %0 : i1 to i32
    %c0_i32_0 = arith.constant 0 : i32
    %2 = arith.cmpi ne, %1, %c0_i32_0 : i32
    scf.if %2 {
      %cst_11 = arith.constant 0xFF800000 : f32
      %12 = vector.broadcast %cst_11 : f32 to vector<2x8x32xf32>
      %c0_12 = arith.constant 0 : index
      %c0_13 = arith.constant 0 : index
      %c0_14 = arith.constant 0 : index
      %13 = vector.load %arg4[%c0_12, %c0_13, %c0_14] : memref<2x8x32xf32, #tpu.memory_space<vmem>>, vector<2x8x32xf32>
      tpu.vector_store %arg4[%c0_12, %c0_13, %c0_14], %12 {strides = array<i32>} : memref<2x8x32xf32, #tpu.memory_space<vmem>>, vector<2x8x32xf32>,
    } else {
    }
    %c0 = arith.constant 0 : index
    %c0_1 = arith.constant 0 : index
    %c0_2 = arith.constant 0 : index
    %3 = vector.load %arg2[%c0, %c0_1, %c0_2] : memref<2x8x32xf32, #tpu.memory_space<vmem>>, vector<2x8x32xf32>
    %4 = vector.shape_cast %3 : vector<2x8x32xf32> to vector<2x1x8x32xf32>
    %c0_3 = arith.constant 0 : index
    %c0_4 = arith.constant 0 : index
    %c0_5 = arith.constant 0 : index
    %5 = vector.load %arg4[%c0_3, %c0_4, %c0_5] : memref<2x8x32xf32, #tpu.memory_space<vmem>>, vector<2x8x32xf32>
    %cst = arith.constant dense<0xFF800000> : vector<2x8x32xf32>
    %6 = vector.multi_reduction <maximumf>, %4, %cst [1] : vector<2x1x8x32xf32> to vector<2x8x32xf32>
    %7 = arith.maximumf %5, %6 : vector<2x8x32xf32>
    %c0_6 = arith.constant 0 : index
    %c0_7 = arith.constant 0 : index
    %c0_8 = arith.constant 0 : index
    %8 = vector.load %arg4[%c0_6, %c0_7, %c0_8] : memref<2x8x32xf32, #tpu.memory_space<vmem>>, vector<2x8x32xf32>
    tpu.vector_store %arg4[%c0_6, %c0_7, %c0_8], %7 {strides = array<i32>} : memref<2x8x32xf32, #tpu.memory_space<vmem>>, vector<2x8x32xf32>,
    %c0_i32_9 = arith.constant 0 : i32
    %9 = arith.cmpi eq, %arg1, %c0_i32_9 : i32
    %10 = arith.extui %9 : i1 to i32
    %c0_i32_10 = arith.constant 0 : i32
    %11 = arith.cmpi ne, %10, %c0_i32_10 : i32
    scf.if %11 {
      %c0_11 = arith.constant 0 : index
      %c0_12 = arith.constant 0 : index
      %c0_13 = arith.constant 0 : index
      %12 = vector.load %arg4[%c0_11, %c0_12, %c0_13] : memref<2x8x32xf32, #tpu.memory_space<vmem>>, vector<2x8x32xf32>
      %cst_14 = arith.constant dense<0xFF800000> : vector<2x32xf32>
      %13 = vector.multi_reduction <maximumf>, %12, %cst_14 [1] : vector<2x8x32xf32> to vector<2x32xf32>
      %c0_15 = arith.constant 0 : index
      %c0_16 = arith.constant 0 : index
      %14 = vector.load %arg3[%c0_15, %c0_16] : memref<2x32xf32, #tpu.memory_space<vmem>>, vector<2x32xf32>
      tpu.vector_store %arg3[%c0_15, %c0_16], %13 {strides = array<i32>} : memref<2x32xf32, #tpu.memory_space<vmem>>, vector<2x32xf32>,
    } else {
    }
    return
  }
  func.func @transform_0(%arg0: i32, %arg1: i32) -> (i32, i32, i32) {
    %c0_i32 = arith.constant 0 : i32
    %c0_i32_0 = arith.constant 0 : i32
    return %arg0, %arg1, %c0_i32 : i32, i32, i32
  }
  func.func @transform_1(%arg0: i32, %arg1: i32) -> (i32, i32) {
    %c0_i32 = arith.constant 0 : i32
    %c0_i32_0 = arith.constant 0 : i32
    return %arg0, %c0_i32 : i32, i32
  }
}

</mosaic_0001>

<llo_original>
// kernel: tpu_custom_call.1
$region0: #{tpu_custom_call.1}
  #allocation0 [shape = 'u32[]', space=smem, size = 0x4, offset = 0x4, fixed_abs, tag = 'smem constant byte address 0x4 - core index']
  #allocation1 [shape = 'u32[144,128]{1,0:T(1,128)}', space=vmem, size = 0x12000, scoped, tag = 'internal scratch']
  #allocation2 [shape = 'f32[2,8,32]{2,1,0:T(8,128)}', space=vmem, size = 0x2000, scoped, tag = 'scratch operand']
  %s0 = inlined_call_operand.hbm [shape: f32[2,8,32], index: 0, kind: input, shape index: {}]
  %s1 = inlined_call_operand.hbm [shape: f32[2,32], index: 1, kind: output, shape index: {}]
  %s2 = sld [smem:[#allocation0]]
  $region26: #{tpu_custom_call.1} parent=0
    _
  %s4 = ssub.s32 1, %s2
  %s5 = scalar_select 0, %s4, %s2
  $region1: #{tpu_custom_call.1} parent=0
    #allocation3 [shape = 'u8[8192]{0}', space=vmem, size = 0x2000, scoped, tag = 'input window, operand 0, single buffered']
    #allocation4 [shape = 's32[1]{0}', space=sflag, size = 0x4, scoped, tag = 'scoped memory for tpu_custom_call.1']
    #allocation5 [shape = 's32[1]{0}', space=sflag, size = 0x4, scoped, tag = 'scoped memory for tpu_custom_call.1']
    #allocation6 [shape = 'u8[1024]{0}', space=vmem, size = 0x400, scoped, tag = 'output window, operand 0, single buffered']
    %6 = vsyncpa [#allocation4], 0
    %7 = vsyncpa [#allocation5], 0
    // Predicated region
    $region2: #{tpu_custom_call.1} parent=1 // pred_check
      _
    $region3: #{tpu_custom_call.1} parent=1 // pred_check_branch
      %9 = sbr.rel (0) target = $region5
    $region4: #{tpu_custom_call.1} parent=1 // pred_region
      %s11 = ssub.s32 256, 256
      %12 = vsyncadd [#allocation4], %s11
      %s13 = sshll.u32 [#allocation3], 4
      %s14 = int_to_ptr.vmem [resolvable:$true] %s13
      %19 = dma.hbm_to_vmem [thread:$0]  %s0, 256, %s14, [#allocation4], 128, 128, 8
    $region5: #{tpu_custom_call.1} parent=1 // pred_fallthru
      _
    // Predicated region
    $region6: #{tpu_custom_call.1} parent=1 // pred_check
      _
    $region7: #{tpu_custom_call.1} parent=1 // pred_check_branch
      %21 = sbr.rel (0) target = $region9
    $region8: #{tpu_custom_call.1} parent=1 // pred_region
      %22 = dma.done [#allocation4], 256
    $region9: #{tpu_custom_call.1} parent=1 // pred_fallthru
      _
    %p23 = scmp.eq.s32.totalorder 0, 0
    // Predicated region
    $region10: #{tpu_custom_call.1} parent=1 // pred_check
      %p24 = pneg %p23
    $region11: #{tpu_custom_call.1} parent=1 // pred_check_branch
      %26 = sbr.rel (%p24) target = $region13
    $region12: #{tpu_custom_call.1} parent=1 // pred_region
      %vm27 = vcmask 261120
      %28 = vst.msk [vmem:[#allocation2] sm:$0xff] %vm27, -inf
      %29 = vst.msk [vmem:[#allocation2 + $0x8] sm:$0xff] %vm27, -inf
    $region13: #{tpu_custom_call.1} parent=1 // pred_fallthru
      _
    %v30 = vld [vmem:[#allocation3] sm:$0xff]
    %v31 = vld [vmem:[#allocation3 + $0x8] sm:$0xff]
    %v32 = vld [vmem:[#allocation2] sm:$0xff]
    %v33 = vld [vmem:[#allocation2 + $0x8] sm:$0xff]
    %v34 = vmax.f32 %v32, %v30
    %v35 = vmax.f32 %v33, %v31
    %vm36 = vcmask 261120
    %37 = vst.msk [vmem:[#allocation2] sm:$0xff] %vm36, %v34
    %38 = vst.msk [vmem:[#allocation2 + $0x8] sm:$0xff] %vm36, %v35
    // Predicated region
    $region14: #{tpu_custom_call.1} parent=1 // pred_check
      %p39 = pneg %p23
    $region15: #{tpu_custom_call.1} parent=1 // pred_check_branch
      %41 = sbr.rel (%p39) target = $region17
    $region16: #{tpu_custom_call.1} parent=1 // pred_region
      %v42 = vld [vmem:[#allocation2] sm:$0xff]
      %v43 = vld [vmem:[#allocation2 + $0x8] sm:$0xff]
      %v44 = vsel %vm36, %v42, -inf
      %v45 = vrot.slane %v44, 4
      %v46 = vmax.f32 %v44, %v45
      %v47 = vrot.slane %v46, 2
      %v48 = vmax.f32 %v46, %v47
      %v49 = vrot.slane %v48, 1
      %v50 = vmax.f32 %v48, %v49
      %v51 = vsel %vm36, %v43, -inf
      %v52 = vrot.slane %v51, 4
      %v53 = vmax.f32 %v51, %v52
      %v54 = vrot.slane %v53, 2
      %v55 = vmax.f32 %v53, %v54
      %v56 = vrot.slane %v55, 1
      %v57 = vmax.f32 %v55, %v56
      %vm60 = vcmask 1041409
      %v61 = vsel %vm60, %v57, %v50
      %vm63 = vcmask 254976
      %64 = vst.msk [vmem:[#allocation6] sm:$0x3] %vm63, %v61
    $region17: #{tpu_custom_call.1} parent=1 // pred_fallthru
      _
    // Predicated region
    $region18: #{tpu_custom_call.1} parent=1 // pred_check
      _
    $region19: #{tpu_custom_call.1} parent=1 // pred_check_branch
      %66 = sbr.rel (0) target = $region21
    $region20: #{tpu_custom_call.1} parent=1 // pred_region
      %s68 = ssub.s32 32, 32
      %69 = vsyncadd [#allocation5], %s68
      %s71 = sshll.u32 [#allocation6], 4
      %s72 = int_to_ptr.vmem [resolvable:$true] %s71
      %74 = dma.vmem_to_hbm [thread:$0]  %s72, 32, %s1, [#allocation5]
    $region21: #{tpu_custom_call.1} parent=1 // pred_fallthru
      _
    // Predicated region
    $region22: #{tpu_custom_call.1} parent=1 // pred_check
      _
    $region23: #{tpu_custom_call.1} parent=1 // pred_check_branch
      %76 = sbr.rel (0) target = $region25
    $region24: #{tpu_custom_call.1} parent=1 // pred_region
      %77 = dma.done [#allocation5], 32
    $region25: #{tpu_custom_call.1} parent=1 // pred_fallthru
      _
    %78 = vsyncpa [#allocation4], 1
    %79 = vsyncpa [#allocation5], 1

</llo_original>
